<compile_context>
chip_gen: v7x
topology: tpu7x:2x2x1
jax: 0.10.0
libtpu: 0.0.40
codegen_flags: <defaults>
</compile_context>

<pallas_src>
import math
import functools

import jax
import jax.numpy as jnp
from jax.experimental import pallas as pl
from jax.experimental.pallas import tpu as pltpu


def _round_up(x: int, m: int) -> int:
    return ((x + m - 1) // m) * m


def _vmem_limit_bytes() -> int:
    """~75% of physical VMEM, capped at 100 MiB (v5e/v6e -> 96 MiB, v7x -> 48 MiB)."""
    try:
        cap = int(pltpu.get_tpu_info().vmem_capacity_bytes)
    except Exception:
        cap = 64 * 1024 * 1024  # conservative fallback
    return int(min(cap - cap // 4, 100 * 1024 * 1024))


# -----------------------------------------------------------------------------
# Kernel
# -----------------------------------------------------------------------------
def _attention_block_kernel(scale_ref,                          # SMEM (1,): 1/(2*tau^2)
                            q_ref, k_ref, v_ref, gb_ref,        # activations (compute dtype)
                            wq_ref, bq_ref, wk_ref, bk_ref,     # projections (1/temp folded into wq/bq)
                            wv_ref, bv_ref, wo_ref, bo_ref,     # fc weights
                            o_ref,
                            kpT_scr, vp_scr):                   # persistent per-batch K/V scratch
    inv_div = scale_ref[0]

    # ---- K/V projections: hoisted, once per batch element (query tile 0) ----
    @pl.when(pl.program_id(1) == 0)
    def _project_kv():
        k = k_ref[0]                                            # (Lk, Dm)
        v = v_ref[0]                                            # (Lk, Dm)
        kp = jnp.dot(k, wk_ref[...], preferred_element_type=jnp.float32) + bk_ref[...]
        vp = jnp.dot(v, wv_ref[...], preferred_element_type=jnp.float32) + bv_ref[...]
        # Store K projected *and transposed*: the per-tile QK^T becomes a plain
        # A@B matmul (transpose amortized to once per batch, off the hot loop).
        kpT_scr[...] = kp.T.astype(kpT_scr.dtype)               # (Dk_p, Lk)
        vp_scr[...] = vp.astype(vp_scr.dtype)                   # (Lk, Dv_p)

    # ---- per query tile ------------------------------------------------------
    q = q_ref[0]                                                # (tq, Dm)
    # 1/temperature is already folded into wq/bq (wrapper-side, one time).
    qp = jnp.dot(q, wq_ref[...], preferred_element_type=jnp.float32) + bq_ref[...]

    attn = jnp.dot(qp.astype(kpT_scr.dtype), kpT_scr[...],
                   preferred_element_type=jnp.float32)          # (tq, Lk)
    attn = attn + gb_ref[0].astype(jnp.float32) * inv_div

    # softmax over keys, kept in f32 (v5e has no bf16 VPU/EUP)
    m = jnp.max(attn, axis=-1, keepdims=True)
    e = jnp.exp(attn - m)
    s = jnp.sum(e, axis=-1, keepdims=True)
    p = e * pl.reciprocal(s, approx=True)                       # EUP recip + one VALU pass
    # TODO(synk): nn.Dropout(attn_dropout) on the attention weights is omitted
    # (inference / eval semantics == identity).

    ctx = jnp.dot(p.astype(vp_scr.dtype), vp_scr[...],
                  preferred_element_type=jnp.float32)           # (tq, Dv_p)
    out = jnp.dot(ctx.astype(wo_ref.dtype), wo_ref[...],
                  preferred_element_type=jnp.float32) + bo_ref[...]
    o_ref[0] = out.astype(o_ref.dtype)


# -----------------------------------------------------------------------------
# Wrapper
# -----------------------------------------------------------------------------
def attention_block_pallas(q, k, v, g_bias, params, *, temperature,
                           mask=None, tq_max=128, compute_dtype=jnp.bfloat16):
    """Forward pass of AttentionBlock.

    q, k, v : (B, L, d_model)
    g_bias  : (>=B, >=L, >=L) gaussian bias tensor (sliced like the torch module)
    params  : dict with wq/bq, wk/bk, wv/bv, wo/bo, tau. Weights stored (in, out).
    returns : (B, L, d_model)
    """
    if mask is not None:
        # TODO(synk): masked_fill(mask, -inf) path not implemented (test uses mask=None).
        raise NotImplementedError("mask is not supported in this Pallas port")

    B, Lq, Dm = q.shape
    _, Lk, _ = k.shape
    assert k.shape == (B, Lk, Dm) and v.shape == (B, Lk, Dm)
    # The torch module indexes g_bias[:B, :len_q, :len_q] (assumes len_q == len_k).
    assert Lq == Lk, "AttentionBlock assumes len_q == len_k"
    out_dtype = q.dtype
    f32 = jnp.float32

    gb = g_bias[:B, :Lq, :Lq].astype(compute_dtype)

    wq, bq = params["wq"], params["bq"]
    wk, bk = params["wk"], params["bk"]
    wv, bv = params["wv"], params["bv"]
    wo, bo = params["wo"], params["bo"]
    tau = params["tau"]
    Dk = wq.shape[1]
    Dv = wv.shape[1]

    # ---- fold 1/temperature into the query projection (free, one-time) -------
    inv_temp = jnp.asarray(1.0 / temperature, f32)
    wq_s = wq.astype(f32) * inv_temp
    bq_s = bq.astype(f32) * inv_temp

    # ---- lane-dense padding of weight OUTPUT dims (exact: zero columns) ------
    Dk_p = _round_up(Dk, 128)
    Dv_p = _round_up(Dv, 128)
    Dm_p = _round_up(Dm, 128)
    wq_p = jnp.pad(wq_s, ((0, 0), (0, Dk_p - Dk))).astype(compute_dtype)
    wk_p = jnp.pad(wk, ((0, 0), (0, Dk_p - Dk))).astype(compute_dtype)
    wv_p = jnp.pad(wv, ((0, 0), (0, Dv_p - Dv))).astype(compute_dtype)
    wo_p = jnp.pad(wo, ((0, Dv_p - Dv), (0, Dm_p - Dm))).astype(compute_dtype)
    bq_p = jnp.pad(bq_s, (0, Dk_p - Dk)).reshape(1, Dk_p).astype(f32)
    bk_p = jnp.pad(bk, (0, Dk_p - Dk)).reshape(1, Dk_p).astype(f32)
    bv_p = jnp.pad(bv, (0, Dv_p - Dv)).reshape(1, Dv_p).astype(f32)
    bo_p = jnp.pad(bo, (0, Dm_p - Dm)).reshape(1, Dm_p).astype(f32)

    # ---- query tiling (tq capped at tq_max, pad Lq only when needed) ---------
    tq = _round_up(Lq, 8) if Lq <= tq_max else tq_max
    Lq_pad = _round_up(Lq, tq)
    q_c = q.astype(compute_dtype)
    k_c = k.astype(compute_dtype)
    v_c = v.astype(compute_dtype)
    if Lq_pad != Lq:
        q_c = jnp.pad(q_c, ((0, 0), (0, Lq_pad - Lq), (0, 0)))
        gb = jnp.pad(gb, ((0, 0), (0, Lq_pad - Lq), (0, 0)))

    # Scalar for the kernel (SMEM): 1 / (2 * tau^2)
    inv_div = jnp.reshape(1.0 / (2.0 * jnp.asarray(tau, f32) ** 2), (1,))

    grid = (B, Lq_pad // tq)
    out = pl.pallas_call(
        _attention_block_kernel,
        out_shape=jax.ShapeDtypeStruct((B, Lq_pad, Dm_p), out_dtype),
        grid_spec=pltpu.PrefetchScalarGridSpec(
            num_scalar_prefetch=0,
            grid=grid,
            in_specs=[
                pl.BlockSpec(memory_space=pltpu.MemorySpace.SMEM),   # inv_div
                pl.BlockSpec((1, tq, Dm), lambda b, i: (b, i, 0)),   # q
                pl.BlockSpec((1, Lk, Dm), lambda b, i: (b, 0, 0)),   # k (resident per batch)
                pl.BlockSpec((1, Lk, Dm), lambda b, i: (b, 0, 0)),   # v (resident per batch)
                pl.BlockSpec((1, tq, Lk), lambda b, i: (b, i, 0)),   # g_bias
                pl.BlockSpec((Dm, Dk_p), lambda b, i: (0, 0)),       # wq (pre-scaled)
                pl.BlockSpec((1, Dk_p), lambda b, i: (0, 0)),        # bq (pre-scaled)
                pl.BlockSpec((Dm, Dk_p), lambda b, i: (0, 0)),       # wk
                pl.BlockSpec((1, Dk_p), lambda b, i: (0, 0)),        # bk
                pl.BlockSpec((Dm, Dv_p), lambda b, i: (0, 0)),       # wv
                pl.BlockSpec((1, Dv_p), lambda b, i: (0, 0)),        # bv
                pl.BlockSpec((Dv_p, Dm_p), lambda b, i: (0, 0)),     # wo
                pl.BlockSpec((1, Dm_p), lambda b, i: (0, 0)),        # bo
            ],
            out_specs=pl.BlockSpec((1, tq, Dm_p), lambda b, i: (b, i, 0)),
            scratch_shapes=[
                pltpu.VMEM((Dk_p, Lk), compute_dtype),   # kp^T, persistent per batch
                pltpu.VMEM((Lk, Dv_p), compute_dtype),   # vp,   persistent per batch
            ],
        ),
        compiler_params=pltpu.CompilerParams(
            dimension_semantics=("parallel", "arbitrary"),
            vmem_limit_bytes=_vmem_limit_bytes(),
        ),
    )(inv_div, q_c, k_c, v_c, gb,
      wq_p, bq_p, wk_p, bk_p, wv_p, bv_p, wo_p, bo_p)

    if Lq_pad != Lq or Dm_p != Dm:
        out = out[:, :Lq, :Dm]           # only when padding was actually added
    return out


# -----------------------------------------------------------------------------
# Parameter init (mirrors the torch module's __init__; weights stored (in, out))
# -----------------------------------------------------------------------------
def init_attention_block_params(key, d_model, d_k, d_v, tau=30.0):
    ks = jax.random.split(key, 8)

    def _bias(kk, fan_in, out_dim):  # nn.Linear default bias init
        bound = 1.0 / math.sqrt(fan_in)
        return jax.random.uniform(kk, (out_dim,), minval=-bound, maxval=bound,
                                  dtype=jnp.float32)

    wq = jax.random.normal(ks[0], (d_model, d_k), dtype=jnp.float32) * math.sqrt(2.0 / (d_model + d_k))
    wk = jax.random.normal(ks[1], (d_model, d_k), dtype=jnp.float32) * math.sqrt(2.0 / (d_model + d_k))
    wv = jax.random.normal(ks[2], (d_model, d_v), dtype=jnp.float32) * math.sqrt(2.0 / (d_model + d_v))
    bq = _bias(ks[3], d_model, d_k)
    bk = _bias(ks[4], d_model, d_k)
    bv = _bias(ks[5], d_model, d_v)
    # fc = Linear(d_v, d_model) with xavier_uniform (gain('linear') == 1.0)
    bound = math.sqrt(6.0 / (d_v + d_model))
    wo = jax.random.uniform(ks[6], (d_v, d_model), minval=-bound, maxval=bound,
                            dtype=jnp.float32)
    bo = _bias(ks[7], d_v, d_model)
    return dict(wq=wq, bq=bq, wk=wk, bk=bk, wv=wv, bv=bv, wo=wo, bo=bo,
                tau=jnp.float32(tau))


# -----------------------------------------------------------------------------
# Pure-JAX references
# -----------------------------------------------------------------------------
def _attention_block_ref(q, k, v, g_bias, params, temperature):
    """Full-f32 reference matching the torch forward (eval mode)."""
    qp = q @ params["wq"] + params["bq"]
    kp = k @ params["wk"] + params["bk"]
    vp = v @ params["wv"] + params["bv"]
    attn = jnp.einsum("bqd,bkd->bqk", qp, kp) / temperature
    gbs = g_bias[: attn.shape[0], : attn.shape[1], : attn.shape[1]]
    attn = attn + gbs / (2.0 * params["tau"] ** 2)
    p = jax.nn.softmax(attn, axis=2)
    out = jnp.einsum("bqk,bkd->bqd", p, vp)
    return out @ params["wo"] + params["bo"]


def _attention_block_ref_mixed(q, k, v, g_bias, params, temperature,
                               compute_dtype=jnp.bfloat16):
    """Emulates the kernel's mixed precision (bf16 MXU operands, f32 accumulate,
    f32 softmax) so the kernel can be validated with a tight tolerance."""
    f32 = jnp.float32
    cd = compute_dtype
    inv_temp = jnp.asarray(1.0 / temperature, f32)
    wq = (params["wq"].astype(f32) * inv_temp).astype(cd)
    bq = params["bq"].astype(f32) * inv_temp
    wk = params["wk"].astype(cd); bk = params["bk"].astype(f32)
    wv = params["wv"].astype(cd); bv = params["bv"].astype(f32)
    wo = params["wo"].astype(cd); bo = params["bo"].astype(f32)
    qc, kc, vc = q.astype(cd), k.astype(cd), v.astype(cd)

    qp = jnp.einsum("bld,dk->blk", qc, wq, preferred_element_type=f32) + bq
    kp = jnp.einsum("bld,dk->blk", kc, wk, preferred_element_type=f32) + bk
    vp = (jnp.einsum("bld,dk->blk", vc, wv, preferred_element_type=f32) + bv).astype(cd)

    attn = jnp.einsum("bqd,bkd->bqk", qp.astype(cd), kp.astype(cd),
                      preferred_element_type=f32)
    inv_div = 1.0 / (2.0 * jnp.asarray(params["tau"], f32) ** 2)
    gb = g_bias[:q.shape[0], :q.shape[1], :q.shape[1]].astype(cd).astype(f32)
    attn = attn + gb * inv_div
    mx = jnp.max(attn, axis=-1, keepdims=True)
    e = jnp.exp(attn - mx)
    p = e / jnp.sum(e, axis=-1, keepdims=True)
    ctx = jnp.einsum("bqk,bkd->bqd", p.astype(cd), vp, preferred_element_type=f32)
    return jnp.einsum("bqd,dm->bqm", ctx.astype(cd), wo, preferred_element_type=f32) + bo


if __name__ == "__main__":
    key = jax.random.PRNGKey(0)
    kq, kk_, kv, kg, kp = jax.random.split(key, 5)

    B, L, d_model, d_k, d_v = 2, 8, 32, 16, 16
    temperature = math.sqrt(d_k)

    q = jax.random.normal(kq, (B, L, d_model), dtype=jnp.float32)
    k = jax.random.normal(kk_, (B, L, d_model), dtype=jnp.float32)
    v = jax.random.normal(kv, (B, L, d_model), dtype=jnp.float32)
    g_bias = jax.random.normal(kg, (B, L, L), dtype=jnp.float32)
    params = init_attention_block_params(kp, d_model, d_k, d_v, tau=30.0)

    fwd = jax.jit(functools.partial(attention_block_pallas, temperature=temperature))
    y = fwd(q, k, v, g_bias, params)
    jax.block_until_ready(y)
    assert y.shape == (B, L, d_model)

    ref_f32 = _attention_block_ref(q, k, v, g_bias, params, temperature)
    ref_mix = _attention_block_ref_mixed(q, k, v, g_bias, params, temperature)
    err_mix = float(jnp.max(jnp.abs(y - ref_mix)))
    err_f32 = float(jnp.max(jnp.abs(y - ref_f32)))
    # Tight check vs. the mixed-precision reference (same bf16 MXU-operand casts);
    # loose check vs. the pure-f32 module reference (bf16 slop is expected).
    assert jnp.allclose(y, ref_mix, atol=2e-2, rtol=2e-2), f"mixed-ref max abs err {err_mix}"
    assert jnp.allclose(y, ref_f32, atol=1e-1, rtol=1e-1), f"f32-ref max abs err {err_f32}"

    print("KERNEL_OK")
</pallas_src>

<mosaic_0001>
module attributes {stable_mosaic.version = 11 : i64} {
  func.func @_attention_block_kernel(%arg0: i32, %arg1: i32, %arg2: memref<1xf32, #tpu.memory_space<smem>>, %arg3: memref<1x8x32xbf16, #tpu.memory_space<vmem>>, %arg4: memref<1x8x32xbf16, #tpu.memory_space<vmem>>, %arg5: memref<1x8x32xbf16, #tpu.memory_space<vmem>>, %arg6: memref<1x8x8xbf16, #tpu.memory_space<vmem>>, %arg7: memref<32x128xbf16, #tpu.memory_space<vmem>>, %arg8: memref<1x128xf32, #tpu.memory_space<vmem>>, %arg9: memref<32x128xbf16, #tpu.memory_space<vmem>>, %arg10: memref<1x128xf32, #tpu.memory_space<vmem>>, %arg11: memref<32x128xbf16, #tpu.memory_space<vmem>>, %arg12: memref<1x128xf32, #tpu.memory_space<vmem>>, %arg13: memref<128x128xbf16, #tpu.memory_space<vmem>>, %arg14: memref<1x128xf32, #tpu.memory_space<vmem>>, %arg15: memref<1x8x128xf32, #tpu.memory_space<vmem>>, %arg16: memref<128x8xbf16, #tpu.memory_space<vmem>>, %arg17: memref<8x128xbf16, #tpu.memory_space<vmem>>) attributes {dimension_semantics = [#tpu.dimension_semantics<parallel>, #tpu.dimension_semantics<arbitrary>], iteration_bounds = array<i64: 2, 1>, scalar_prefetch = 0 : i64, scratch_operands = 2 : i64, tpu.core_type = #tpu.core_type<tc>, window_params = [{transform_indices = @transform_0, window_bounds = array<i64: 1>}, {transform_indices = @transform_1, window_bounds = array<i64: 1, 8, 32>}, {transform_indices = @transform_2, window_bounds = array<i64: 1, 8, 32>}, {transform_indices = @transform_3, window_bounds = array<i64: 1, 8, 32>}, {transform_indices = @transform_4, window_bounds = array<i64: 1, 8, 8>}, {pipeline_mode = #tpu.pipeline_mode<synchronous>, transform_indices = @transform_5, window_bounds = array<i64: 32, 128>}, {pipeline_mode = #tpu.pipeline_mode<synchronous>, transform_indices = @transform_6, window_bounds = array<i64: 1, 128>}, {pipeline_mode = #tpu.pipeline_mode<synchronous>, transform_indices = @transform_7, window_bounds = array<i64: 32, 128>}, {pipeline_mode = #tpu.pipeline_mode<synchronous>, transform_indices = @transform_8, window_bounds = array<i64: 1, 128>}, {pipeline_mode = #tpu.pipeline_mode<synchronous>, transform_indices = @transform_9, window_bounds = array<i64: 32, 128>}, {pipeline_mode = #tpu.pipeline_mode<synchronous>, transform_indices = @transform_10, window_bounds = array<i64: 1, 128>}, {pipeline_mode = #tpu.pipeline_mode<synchronous>, transform_indices = @transform_11, window_bounds = array<i64: 128, 128>}, {pipeline_mode = #tpu.pipeline_mode<synchronous>, transform_indices = @transform_12, window_bounds = array<i64: 1, 128>}, {transform_indices = @transform_13, window_bounds = array<i64: 1, 8, 128>}]} {
    %c0 = arith.constant 0 : index
    %0 = memref.load %arg2[%c0] : memref<1xf32, #tpu.memory_space<smem>>
    %c0_i32 = arith.constant 0 : i32
    %1 = arith.cmpi eq, %arg1, %c0_i32 : i32
    %2 = arith.extui %1 : i1 to i32
    %c0_i32_0 = arith.constant 0 : i32
    %3 = arith.cmpi ne, %2, %c0_i32_0 : i32
    scf.if %3 {
      %c0_27 = arith.constant 0 : index
      %c0_28 = arith.constant 0 : index
      %c0_29 = arith.constant 0 : index
      %42 = vector.load %arg4[%c0_27, %c0_28, %c0_29] : memref<1x8x32xbf16, #tpu.memory_space<vmem>>, vector<1x8x32xbf16>
      %43 = vector.shape_cast %42 : vector<1x8x32xbf16> to vector<8x32xbf16>
      %c0_30 = arith.constant 0 : index
      %c0_31 = arith.constant 0 : index
      %c0_32 = arith.constant 0 : index
      %44 = vector.load %arg5[%c0_30, %c0_31, %c0_32] : memref<1x8x32xbf16, #tpu.memory_space<vmem>>, vector<1x8x32xbf16>
      %45 = vector.shape_cast %44 : vector<1x8x32xbf16> to vector<8x32xbf16>
      %c0_33 = arith.constant 0 : index
      %c0_34 = arith.constant 0 : index
      %46 = vector.load %arg9[%c0_33, %c0_34] : memref<32x128xbf16, #tpu.memory_space<vmem>>, vector<32x128xbf16>
      %cst_35 = arith.constant dense<0.000000e+00> : vector<8x128xf32>
      %47 = tpu.matmul %43, %46, %cst_35 {dimension_numbers = #tpu.dot_dimension_numbers<[1], [0], [0], [1], [0, 0, 1, 1], [], []>} : vector<8x32xbf16>, vector<32x128xbf16>, vector<8x128xf32> -> vector<8x128xf32>
      %c0_36 = arith.constant 0 : index
      %c0_37 = arith.constant 0 : index
      %48 = vector.load %arg10[%c0_36, %c0_37] : memref<1x128xf32, #tpu.memory_space<vmem>>, vector<1x128xf32>
      %49 = vector.broadcast %48 : vector<1x128xf32> to vector<8x128xf32>
      %50 = arith.addf %47, %49 : vector<8x128xf32>
      %c0_38 = arith.constant 0 : index
      %c0_39 = arith.constant 0 : index
      %51 = vector.load %arg11[%c0_38, %c0_39] : memref<32x128xbf16, #tpu.memory_space<vmem>>, vector<32x128xbf16>
      %cst_40 = arith.constant dense<0.000000e+00> : vector<8x128xf32>
      %52 = tpu.matmul %45, %51, %cst_40 {dimension_numbers = #tpu.dot_dimension_numbers<[1], [0], [0], [1], [0, 0, 1, 1], [], []>} : vector<8x32xbf16>, vector<32x128xbf16>, vector<8x128xf32> -> vector<8x128xf32>
      %c0_41 = arith.constant 0 : index
      %c0_42 = arith.constant 0 : index
      %53 = vector.load %arg12[%c0_41, %c0_42] : memref<1x128xf32, #tpu.memory_space<vmem>>, vector<1x128xf32>
      %54 = vector.broadcast %53 : vector<1x128xf32> to vector<8x128xf32>
      %55 = arith.addf %52, %54 : vector<8x128xf32>
      %56 = tpu.transpose %50, [1, 0] : vector<8x128xf32> -> vector<128x8xf32>
      %57 = arith.truncf %56 : vector<128x8xf32> to vector<128x8xbf16>
      %c0_43 = arith.constant 0 : index
      %c0_44 = arith.constant 0 : index
      %58 = vector.load %arg16[%c0_43, %c0_44] : memref<128x8xbf16, #tpu.memory_space<vmem>>, vector<128x8xbf16>
      tpu.vector_store %arg16[%c0_43, %c0_44], %57 {strides = array<i32>} : memref<128x8xbf16, #tpu.memory_space<vmem>>, vector<128x8xbf16>,
      %59 = arith.truncf %55 : vector<8x128xf32> to vector<8x128xbf16>
      %c0_45 = arith.constant 0 : index
      %c0_46 = arith.constant 0 : index
      %60 = vector.load %arg17[%c0_45, %c0_46] : memref<8x128xbf16, #tpu.memory_space<vmem>>, vector<8x128xbf16>
      tpu.vector_store %arg17[%c0_45, %c0_46], %59 {strides = array<i32>} : memref<8x128xbf16, #tpu.memory_space<vmem>>, vector<8x128xbf16>,
    } else {
    }
    %c0_1 = arith.constant 0 : index
    %c0_2 = arith.constant 0 : index
    %c0_3 = arith.constant 0 : index
    %4 = vector.load %arg3[%c0_1, %c0_2, %c0_3] : memref<1x8x32xbf16, #tpu.memory_space<vmem>>, vector<1x8x32xbf16>
    %5 = vector.shape_cast %4 : vector<1x8x32xbf16> to vector<8x32xbf16>
    %c0_4 = arith.constant 0 : index
    %c0_5 = arith.constant 0 : index
    %6 = vector.load %arg7[%c0_4, %c0_5] : memref<32x128xbf16, #tpu.memory_space<vmem>>, vector<32x128xbf16>
    %cst = arith.constant dense<0.000000e+00> : vector<8x128xf32>
    %7 = tpu.matmul %5, %6, %cst {dimension_numbers = #tpu.dot_dimension_numbers<[1], [0], [0], [1], [0, 0, 1, 1], [], []>} : vector<8x32xbf16>, vector<32x128xbf16>, vector<8x128xf32> -> vector<8x128xf32>
    %c0_6 = arith.constant 0 : index
    %c0_7 = arith.constant 0 : index
    %8 = vector.load %arg8[%c0_6, %c0_7] : memref<1x128xf32, #tpu.memory_space<vmem>>, vector<1x128xf32>
    %9 = vector.broadcast %8 : vector<1x128xf32> to vector<8x128xf32>
    %10 = arith.addf %7, %9 : vector<8x128xf32>
    %11 = arith.truncf %10 : vector<8x128xf32> to vector<8x128xbf16>
    %c0_8 = arith.constant 0 : index
    %c0_9 = arith.constant 0 : index
    %12 = vector.load %arg16[%c0_8, %c0_9] : memref<128x8xbf16, #tpu.memory_space<vmem>>, vector<128x8xbf16>
    %cst_10 = arith.constant dense<0.000000e+00> : vector<8x8xf32>
    %13 = tpu.matmul %11, %12, %cst_10 {dimension_numbers = #tpu.dot_dimension_numbers<[1], [0], [0], [1], [0, 0, 1, 1], [], []>} : vector<8x128xbf16>, vector<128x8xbf16>, vector<8x8xf32> -> vector<8x8xf32>
    %c0_11 = arith.constant 0 : index
    %c0_12 = arith.constant 0 : index
    %c0_13 = arith.constant 0 : index
    %14 = vector.load %arg6[%c0_11, %c0_12, %c0_13] : memref<1x8x8xbf16, #tpu.memory_space<vmem>>, vector<1x8x8xbf16>
    %15 = vector.shape_cast %14 : vector<1x8x8xbf16> to vector<8x8xbf16>
    %16 = arith.extf %15 : vector<8x8xbf16> to vector<8x8xf32>
    %17 = vector.broadcast %0 : f32 to vector<8x8xf32>
    %18 = arith.mulf %16, %17 : vector<8x8xf32>
    %19 = arith.addf %13, %18 : vector<8x8xf32>
    %cst_14 = arith.constant dense<0xFF800000> : vector<8xf32>
    %20 = vector.multi_reduction <maximumf>, %19, %cst_14 [1] : vector<8x8xf32> to vector<8xf32>
    %21 = vector.shape_cast %20 : vector<8xf32> to vector<8x1xf32>
    %22 = vector.broadcast %21 : vector<8x1xf32> to vector<8x8xf32>
    %23 = arith.subf %19, %22 : vector<8x8xf32>
    %24 = math.exp %23 : vector<8x8xf32>
    %cst_15 = arith.constant dense<0.000000e+00> : vector<8xf32>
    %25 = vector.multi_reduction <add>, %24, %cst_15 [1] : vector<8x8xf32> to vector<8xf32>
    %26 = vector.shape_cast %25 : vector<8xf32> to vector<8x1xf32>
    %27 = tpu.reciprocal %26 {approx = true} : vector<8x1xf32> -> vector<8x1xf32>
    %28 = vector.broadcast %27 : vector<8x1xf32> to vector<8x8xf32>
    %29 = arith.mulf %24, %28 : vector<8x8xf32>
    %30 = arith.truncf %29 : vector<8x8xf32> to vector<8x8xbf16>
    %c0_16 = arith.constant 0 : index
    %c0_17 = arith.constant 0 : index
    %31 = vector.load %arg17[%c0_16, %c0_17] : memref<8x128xbf16, #tpu.memory_space<vmem>>, vector<8x128xbf16>
    %cst_18 = arith.constant dense<0.000000e+00> : vector<8x128xf32>
    %32 = tpu.matmul %30, %31, %cst_18 {dimension_numbers = #tpu.dot_dimension_numbers<[1], [0], [0], [1], [0, 0, 1, 1], [], []>} : vector<8x8xbf16>, vector<8x128xbf16>, vector<8x128xf32> -> vector<8x128xf32>
    %33 = arith.truncf %32 : vector<8x128xf32> to vector<8x128xbf16>
    %c0_19 = arith.constant 0 : index
    %c0_20 = arith.constant 0 : index
    %34 = vector.load %arg13[%c0_19, %c0_20] : memref<128x128xbf16, #tpu.memory_space<vmem>>, vector<128x128xbf16>
    %cst_21 = arith.constant dense<0.000000e+00> : vector<8x128xf32>
    %35 = tpu.matmul %33, %34, %cst_21 {dimension_numbers = #tpu.dot_dimension_numbers<[1], [0], [0], [1], [0, 0, 1, 1], [], []>} : vector<8x128xbf16>, vector<128x128xbf16>, vector<8x128xf32> -> vector<8x128xf32>
    %c0_22 = arith.constant 0 : index
    %c0_23 = arith.constant 0 : index
    %36 = vector.load %arg14[%c0_22, %c0_23] : memref<1x128xf32, #tpu.memory_space<vmem>>, vector<1x128xf32>
    %37 = vector.broadcast %36 : vector<1x128xf32> to vector<8x128xf32>
    %38 = arith.addf %35, %37 : vector<8x128xf32>
    %c0_24 = arith.constant 0 : index
    %c0_25 = arith.constant 0 : index
    %c0_26 = arith.constant 0 : index
    %39 = vector.load %arg15[%c0_24, %c0_25, %c0_26] : memref<1x8x128xf32, #tpu.memory_space<vmem>>, vector<1x8x128xf32>
    %40 = vector.shape_cast %39 : vector<1x8x128xf32> to vector<8x128xf32>
    %41 = vector.shape_cast %38 : vector<8x128xf32> to vector<1x8x128xf32>
    tpu.vector_store %arg15[%c0_24, %c0_25, %c0_26], %41 {strides = array<i32>} : memref<1x8x128xf32, #tpu.memory_space<vmem>>, vector<1x8x128xf32>,
    return
  }
  func.func @transform_0(%arg0: i32, %arg1: i32) -> i32 {
    %c0_i32 = arith.constant 0 : i32
    %c0_i32_0 = arith.constant 0 : i32
    return %c0_i32 : i32
  }
  func.func @transform_1(%arg0: i32, %arg1: i32) -> (i32, i32, i32) {
    %c0_i32 = arith.constant 0 : i32
    %c0_i32_0 = arith.constant 0 : i32
    return %arg0, %arg1, %c0_i32 : i32, i32, i32
  }
  func.func @transform_2(%arg0: i32, %arg1: i32) -> (i32, i32, i32) {
    %c0_i32 = arith.constant 0 : i32
    %c0_i32_0 = arith.constant 0 : i32
    %c0_i32_1 = arith.constant 0 : i32
    return %arg0, %c0_i32, %c0_i32_0 : i32, i32, i32
  }
  func.func @transform_3(%arg0: i32, %arg1: i32) -> (i32, i32, i32) {
    %c0_i32 = arith.constant 0 : i32
    %c0_i32_0 = arith.constant 0 : i32
    %c0_i32_1 = arith.constant 0 : i32
    return %arg0, %c0_i32, %c0_i32_0 : i32, i32, i32
  }
  func.func @transform_4(%arg0: i32, %arg1: i32) -> (i32, i32, i32) {
    %c0_i32 = arith.constant 0 : i32
    %c0_i32_0 = arith.constant 0 : i32
    return %arg0, %arg1, %c0_i32 : i32, i32, i32
  }
  func.func @transform_5(%arg0: i32, %arg1: i32) -> (i32, i32) {
    %c0_i32 = arith.constant 0 : i32
    %c0_i32_0 = arith.constant 0 : i32
    %c0_i32_1 = arith.constant 0 : i32
    return %c0_i32, %c0_i32_0 : i32, i32
  }
  func.func @transform_6(%arg0: i32, %arg1: i32) -> (i32, i32) {
    %c0_i32 = arith.constant 0 : i32
    %c0_i32_0 = arith.constant 0 : i32
    %c0_i32_1 = arith.constant 0 : i32
    return %c0_i32, %c0_i32_0 : i32, i32
  }
  func.func @transform_7(%arg0: i32, %arg1: i32) -> (i32, i32) {
    %c0_i32 = arith.constant 0 : i32
    %c0_i32_0 = arith.constant 0 : i32
    %c0_i32_1 = arith.constant 0 : i32
    return %c0_i32, %c0_i32_0 : i32, i32
  }
  func.func @transform_8(%arg0: i32, %arg1: i32) -> (i32, i32) {
    %c0_i32 = arith.constant 0 : i32
    %c0_i32_0 = arith.constant 0 : i32
    %c0_i32_1 = arith.constant 0 : i32
    return %c0_i32, %c0_i32_0 : i32, i32
  }
  func.func @transform_9(%arg0: i32, %arg1: i32) -> (i32, i32) {
    %c0_i32 = arith.constant 0 : i32
    %c0_i32_0 = arith.constant 0 : i32
    %c0_i32_1 = arith.constant 0 : i32
    return %c0_i32, %c0_i32_0 : i32, i32
  }
  func.func @transform_10(%arg0: i32, %arg1: i32) -> (i32, i32) {
    %c0_i32 = arith.constant 0 : i32
    %c0_i32_0 = arith.constant 0 : i32
    %c0_i32_1 = arith.constant 0 : i32
    return %c0_i32, %c0_i32_0 : i32, i32
  }
  func.func @transform_11(%arg0: i32, %arg1: i32) -> (i32, i32) {
    %c0_i32 = arith.constant 0 : i32
    %c0_i32_0 = arith.constant 0 : i32
    %c0_i32_1 = arith.constant 0 : i32
    return %c0_i32, %c0_i32_0 : i32, i32
  }
  func.func @transform_12(%arg0: i32, %arg1: i32) -> (i32, i32) {
    %c0_i32 = arith.constant 0 : i32
    %c0_i32_0 = arith.constant 0 : i32
    %c0_i32_1 = arith.constant 0 : i32
    return %c0_i32, %c0_i32_0 : i32, i32
  }
  func.func @transform_13(%arg0: i32, %arg1: i32) -> (i32, i32, i32) {
    %c0_i32 = arith.constant 0 : i32
    %c0_i32_0 = arith.constant 0 : i32
    return %arg0, %arg1, %c0_i32 : i32, i32, i32
  }
}

</mosaic_0001>

<llo_original>
// kernel: attention_block_pallas.1
$region0: #{attention_block_pallas.1}
  #allocation0 [shape = 'u32[]', space=smem, size = 0x4, offset = 0x4, fixed_abs, tag = 'smem constant byte address 0x4 - core index']
  #allocation1 [shape = 'u32[144,128]{1,0:T(1,128)}', space=vmem, size = 0x12000, scoped, tag = 'internal scratch']
  #allocation2 [shape = 'bf16[128,8]{1,0:T(16,128)(2,1)}', space=vmem, size = 0x8000, scoped, tag = 'scratch operand']
  #allocation3 [shape = 'bf16[8,128]{1,0:T(8,128)(2,1)}', space=vmem, size = 0x800, scoped, tag = 'scratch operand']
  #allocation4 [shape = 'f32[1]{0:T(128)S(6)}', space=smem, size = 0x200, scoped, tag = 'scoped memory for attention_block_pallas.1']
  %s0 = inlined_call_operand.<no memory space> [shape: f32[1], index: 0, kind: input, shape index: {}]
  %s1 = inlined_call_operand.vmem [shape: bf16[2,8,32], index: 1, kind: input, shape index: {}]
  %s2 = inlined_call_operand.vmem [shape: bf16[2,8,32], index: 2, kind: input, shape index: {}]
  %s3 = inlined_call_operand.vmem [shape: bf16[2,8,32], index: 3, kind: input, shape index: {}]
  %s4 = inlined_call_operand.vmem [shape: bf16[2,8,8], index: 4, kind: input, shape index: {}]
  %s5 = inlined_call_operand.vmem [shape: bf16[32,128], index: 5, kind: input, shape index: {}]
  %s6 = inlined_call_operand.vmem [shape: f32[1,128], index: 6, kind: input, shape index: {}]
  %s7 = inlined_call_operand.vmem [shape: bf16[32,128], index: 7, kind: input, shape index: {}]
  %s8 = inlined_call_operand.vmem [shape: f32[1,128], index: 8, kind: input, shape index: {}]
  %s9 = inlined_call_operand.vmem [shape: bf16[32,128], index: 9, kind: input, shape index: {}]
  %s10 = inlined_call_operand.vmem [shape: f32[1,128], index: 10, kind: input, shape index: {}]
  %s11 = inlined_call_operand.vmem [shape: bf16[128,128], index: 11, kind: input, shape index: {}]
  %s12 = inlined_call_operand.vmem [shape: f32[1,128], index: 12, kind: input, shape index: {}]
  %s13 = inlined_call_operand.hbm [shape: f32[2,8,128], index: 13, kind: output, shape index: {}]
  %s14 = sld [smem:[#allocation0]]
  $region89: #{attention_block_pallas.1} parent=0
    _
  %s16 = ssub.s32 1, %s14
  %s17 = scalar_select 0, %s16, %s14
  %18 = sst [smem:[#allocation4]] %s0
  $region1: #{attention_block_pallas.1} parent=0
    #allocation5 [shape = 'u8[8192]{0}', space=vmem, size = 0x2000, scoped, tag = 'output window, operand 0']
    #allocation6 [shape = 's32[2]{0}', space=sflag, size = 0x8, scoped, tag = 'scoped memory for attention_block_pallas.1']
    %19 = vsyncpa [#allocation6], 0
    %s20 = scalar_lea.sflag [#allocation6], 1
    %21 = vsyncpa %s20, 0
    loop: start=0, step=1, limit=4
    $region2: #{attention_block_pallas.1} parent=1 // loop_pre_header
      _
    $region3: #{attention_block_pallas.1} parent=1 // loop_header
      %s23 = sphi 0, %s27
      %p24 = scmp.ge.s32.totalorder %s23, 4
      %s30 = sphi 0, %s42
      %s31 = sphi 0, %s38
      %s32 = sphi 0, %s30
      %s33 = sphi 0, %s31
      %s34 = sphi 0, %s32
      %s35 = sphi 0, %s33
      %s43 = sphi 0, %s43
      %s45 = sphi 0, %s43
      %s46 = sphi 0, %s45
      %s60 = sphi 0, %s46
      %s68 = sphi 0, %s70
      %s71 = sphi 0, %s68
      %s72 = sphi 0, %s71
      %s88 = sphi 0, %s72
      %s94 = sphi 0, %s96
      %s97 = sphi 0, %s94
      %s98 = sphi 0, %s97
      %s114 = sphi 0, %s98
      %s120 = sphi 0, %s122
      %s123 = sphi 0, %s120
      %s124 = sphi 0, %s123
      %s140 = sphi 0, %s124
      %s148 = sphi 0, %s150
      %s151 = sphi 0, %s148
      %s152 = sphi 0, %s151
      %s168 = sphi 0, %s152
      %s172 = sphi 0, %s172
      %s174 = sphi 0, %s172
      %s175 = sphi 0, %s174
      %s189 = sphi 0, %s175
      %s193 = sphi 0, %s193
      %s195 = sphi 0, %s193
      %s196 = sphi 0, %s195
      %s210 = sphi 0, %s196
      %s214 = sphi 0, %s214
      %s216 = sphi 0, %s214
      %s217 = sphi 0, %s216
      %s231 = sphi 0, %s217
      %s235 = sphi 0, %s235
      %s237 = sphi 0, %s235
      %s238 = sphi 0, %s237
      %s252 = sphi 0, %s238
      %s256 = sphi 0, %s256
      %s258 = sphi 0, %s256
      %s259 = sphi 0, %s258
      %s273 = sphi 0, %s259
      %s277 = sphi 0, %s277
      %s279 = sphi 0, %s277
      %s280 = sphi 0, %s279
      %s294 = sphi 0, %s280
      %s298 = sphi 0, %s298
      %s300 = sphi 0, %s298
      %s301 = sphi 0, %s300
      %s315 = sphi 0, %s301
      %s319 = sphi 0, %s319
      %s321 = sphi 0, %s319
      %s322 = sphi 0, %s321
      %s336 = sphi 0, %s322
      %s344 = sphi 0, %s346
      %s347 = sphi 0, %s344
      %s348 = sphi 0, %s347
      %s364 = sphi 0, %s348
    $region4: #{attention_block_pallas.1} parent=1 // loop_header_branch
      %26 = sbr.rel (%p24) target = $region8
    $region5: #{attention_block_pallas.1} parent=1 // loop_body
      %s28 = ssub.s32 %s23, 1
      %s29 = ssub.s32 %s23, 2
      %s36 = sadd.s32 1, %s31
      %p37 = scmp.ge.s32.totalorder %s36, 1
      %s38 = scalar_select %p37, 0, %s36
      %s39 = sadd.s32 1, %s30
      %s40 = scalar_select %p37, %s39, %s30
      %p41 = scmp.ge.s32.totalorder %s40, 2
      %s42 = scalar_select %p41, 0, %s40
      %s44 = sadd.s32 %s43, 1
      %p47 = scmp.eq.s32.totalorder %s23, 1
      %p48 = scmp.ne.s32.totalorder %s43, %s45
      %p49 = scmp.eq.s32.totalorder %s23, 0
      %p50 = por %p48, %p49
      %p51 = scmp.ne.s32.totalorder %s43, %s45
      %p52 = scmp.eq.s32.totalorder %s28, 1
      %p53 = por %p51, %p52
      %p54 = scmp.ne.s32.totalorder %s45, %s46
      %p55 = scmp.eq.s32.totalorder %s28, 0
      %p56 = por %p54, %p55
      %p57 = scmp.ne.s32.totalorder %s45, %s46
      %p58 = scmp.eq.s32.totalorder %s29, 1
      %p59 = por %p57, %p58
      %p61 = scmp.ne.s32.totalorder %s46, %s60
      %p62 = scmp.eq.s32.totalorder %s29, 0
      %p63 = por %p61, %p62
      %s64 = ssub.s32 %s30, %s42
      %s65 = ssub.s32 %s31, %s38
      %s66 = sor.u32 %s64, %s65
      %p67 = scmp.eq.s32.totalorder %s66, 0
      %s69 = sadd.s32 %s68, 1
      %s70 = scalar_select %p67, %s68, %s69
      %p73 = pneg %p67
      %p74 = scmp.eq.s32.totalorder %s23, 1
      %p75 = por %p73, %p74
      %p76 = scmp.ne.s32.totalorder %s68, %s71
      %p77 = scmp.eq.s32.totalorder %s23, 0
      %p78 = por %p76, %p77
      %p79 = scmp.ne.s32.totalorder %s68, %s71
      %p80 = scmp.eq.s32.totalorder %s28, 1
      %p81 = por %p79, %p80
      %p82 = scmp.ne.s32.totalorder %s71, %s72
      %p83 = scmp.eq.s32.totalorder %s28, 0
      %p84 = por %p82, %p83
      %p85 = scmp.ne.s32.totalorder %s71, %s72
      %p86 = scmp.eq.s32.totalorder %s29, 1
      %p87 = por %p85, %p86
      %p89 = scmp.ne.s32.totalorder %s72, %s88
      %p90 = scmp.eq.s32.totalorder %s29, 0
      %p91 = por %p89, %p90
      %s92 = ssub.s32 %s30, %s42
      %p93 = scmp.eq.s32.totalorder %s92, 0
      %s95 = sadd.s32 %s94, 1
      %s96 = scalar_select %p93, %s94, %s95
      %p99 = pneg %p93
      %p100 = scmp.eq.s32.totalorder %s23, 1
      %p101 = por %p99, %p100
      %p102 = scmp.ne.s32.totalorder %s94, %s97
      %p103 = scmp.eq.s32.totalorder %s23, 0
      %p104 = por %p102, %p103
      %p105 = scmp.ne.s32.totalorder %s94, %s97
      %p106 = scmp.eq.s32.totalorder %s28, 1
      %p107 = por %p105, %p106
      %p108 = scmp.ne.s32.totalorder %s97, %s98
      %p109 = scmp.eq.s32.totalorder %s28, 0
      %p110 = por %p108, %p109
      %p111 = scmp.ne.s32.totalorder %s97, %s98
      %p112 = scmp.eq.s32.totalorder %s29, 1
      %p113 = por %p111, %p112
      %p115 = scmp.ne.s32.totalorder %s98, %s114
      %p116 = scmp.eq.s32.totalorder %s29, 0
      %p117 = por %p115, %p116
      %s118 = ssub.s32 %s30, %s42
      %p119 = scmp.eq.s32.totalorder %s118, 0
      %s121 = sadd.s32 %s120, 1
      %s122 = scalar_select %p119, %s120, %s121
      %p125 = pneg %p119
      %p126 = scmp.eq.s32.totalorder %s23, 1
      %p127 = por %p125, %p126
      %p128 = scmp.ne.s32.totalorder %s120, %s123
      %p129 = scmp.eq.s32.totalorder %s23, 0
      %p130 = por %p128, %p129
      %p131 = scmp.ne.s32.totalorder %s120, %s123
      %p132 = scmp.eq.s32.totalorder %s28, 1
      %p133 = por %p131, %p132
      %p134 = scmp.ne.s32.totalorder %s123, %s124
      %p135 = scmp.eq.s32.totalorder %s28, 0
      %p136 = por %p134, %p135
      %p137 = scmp.ne.s32.totalorder %s123, %s124
      %p138 = scmp.eq.s32.totalorder %s29, 1
      %p139 = por %p137, %p138
      %p141 = scmp.ne.s32.totalorder %s124, %s140
      %p142 = scmp.eq.s32.totalorder %s29, 0
      %p143 = por %p141, %p142
      %s144 = ssub.s32 %s30, %s42
      %s145 = ssub.s32 %s31, %s38
      %s146 = sor.u32 %s144, %s145
      %p147 = scmp.eq.s32.totalorder %s146, 0
      %s149 = sadd.s32 %s148, 1
      %s150 = scalar_select %p147, %s148, %s149
      %p153 = pneg %p147
      %p154 = scmp.eq.s32.totalorder %s23, 1
      %p155 = por %p153, %p154
      %p156 = scmp.ne.s32.totalorder %s148, %s151
      %p157 = scmp.eq.s32.totalorder %s23, 0
      %p158 = por %p156, %p157
      %p159 = scmp.ne.s32.totalorder %s148, %s151
      %p160 = scmp.eq.s32.totalorder %s28, 1
      %p161 = por %p159, %p160
      %p162 = scmp.ne.s32.totalorder %s151, %s152
      %p163 = scmp.eq.s32.totalorder %s28, 0
      %p164 = por %p162, %p163
      %p165 = scmp.ne.s32.totalorder %s151, %s152
      %p166 = scmp.eq.s32.totalorder %s29, 1
      %p167 = por %p165, %p166
      %p169 = scmp.ne.s32.totalorder %s152, %s168
      %p170 = scmp.eq.s32.totalorder %s29, 0
      %p171 = por %p169, %p170
      %s173 = sadd.s32 %s172, 1
      %p176 = scmp.eq.s32.totalorder %s23, 1
      %p177 = scmp.ne.s32.totalorder %s172, %s174
      %p178 = scmp.eq.s32.totalorder %s23, 0
      %p179 = por %p177, %p178
      %p180 = scmp.ne.s32.totalorder %s172, %s174
      %p181 = scmp.eq.s32.totalorder %s28, 1
      %p182 = por %p180, %p181
      %p183 = scmp.ne.s32.totalorder %s174, %s175
      %p184 = scmp.eq.s32.totalorder %s28, 0
      %p185 = por %p183, %p184
      %p186 = scmp.ne.s32.totalorder %s174, %s175
      %p187 = scmp.eq.s32.totalorder %s29, 1
      %p188 = por %p186, %p187
      %p190 = scmp.ne.s32.totalorder %s175, %s189
      %p191 = scmp.eq.s32.totalorder %s29, 0
      %p192 = por %p190, %p191
      %s194 = sadd.s32 %s193, 1
      %p197 = scmp.eq.s32.totalorder %s23, 1
      %p198 = scmp.ne.s32.totalorder %s193, %s195
      %p199 = scmp.eq.s32.totalorder %s23, 0
      %p200 = por %p198, %p199
      %p201 = scmp.ne.s32.totalorder %s193, %s195
      %p202 = scmp.eq.s32.totalorder %s28, 1
      %p203 = por %p201, %p202
      %p204 = scmp.ne.s32.totalorder %s195, %s196
      %p205 = scmp.eq.s32.totalorder %s28, 0
      %p206 = por %p204, %p205
      %p207 = scmp.ne.s32.totalorder %s195, %s196
      %p208 = scmp.eq.s32.totalorder %s29, 1
      %p209 = por %p207, %p208
      %p211 = scmp.ne.s32.totalorder %s196, %s210
      %p212 = scmp.eq.s32.totalorder %s29, 0
      %p213 = por %p211, %p212
      %s215 = sadd.s32 %s214, 1
      %p218 = scmp.eq.s32.totalorder %s23, 1
      %p219 = scmp.ne.s32.totalorder %s214, %s216
      %p220 = scmp.eq.s32.totalorder %s23, 0
      %p221 = por %p219, %p220
      %p222 = scmp.ne.s32.totalorder %s214, %s216
      %p223 = scmp.eq.s32.totalorder %s28, 1
      %p224 = por %p222, %p223
      %p225 = scmp.ne.s32.totalorder %s216, %s217
      %p226 = scmp.eq.s32.totalorder %s28, 0
      %p227 = por %p225, %p226
      %p228 = scmp.ne.s32.totalorder %s216, %s217
      %p229 = scmp.eq.s32.totalorder %s29, 1
      %p230 = por %p228, %p229
      %p232 = scmp.ne.s32.totalorder %s217, %s231
      %p233 = scmp.eq.s32.totalorder %s29, 0
      %p234 = por %p232, %p233
      %s236 = sadd.s32 %s235, 1
      %p239 = scmp.eq.s32.totalorder %s23, 1
      %p240 = scmp.ne.s32.totalorder %s235, %s237
      %p241 = scmp.eq.s32.totalorder %s23, 0
      %p242 = por %p240, %p241
      %p243 = scmp.ne.s32.totalorder %s235, %s237
      %p244 = scmp.eq.s32.totalorder %s28, 1
      %p245 = por %p243, %p244
      %p246 = scmp.ne.s32.totalorder %s237, %s238
      %p247 = scmp.eq.s32.totalorder %s28, 0
      %p248 = por %p246, %p247
      %p249 = scmp.ne.s32.totalorder %s237, %s238
      %p250 = scmp.eq.s32.totalorder %s29, 1
      %p251 = por %p249, %p250
      %p253 = scmp.ne.s32.totalorder %s238, %s252
      %p254 = scmp.eq.s32.totalorder %s29, 0
      %p255 = por %p253, %p254
      %s257 = sadd.s32 %s256, 1
      %p260 = scmp.eq.s32.totalorder %s23, 1
      %p261 = scmp.ne.s32.totalorder %s256, %s258
      %p262 = scmp.eq.s32.totalorder %s23, 0
      %p263 = por %p261, %p262
      %p264 = scmp.ne.s32.totalorder %s256, %s258
      %p265 = scmp.eq.s32.totalorder %s28, 1
      %p266 = por %p264, %p265
      %p267 = scmp.ne.s32.totalorder %s258, %s259
      %p268 = scmp.eq.s32.totalorder %s28, 0
      %p269 = por %p267, %p268
      %p270 = scmp.ne.s32.totalorder %s258, %s259
      %p271 = scmp.eq.s32.totalorder %s29, 1
      %p272 = por %p270, %p271
      %p274 = scmp.ne.s32.totalorder %s259, %s273
      %p275 = scmp.eq.s32.totalorder %s29, 0
      %p276 = por %p274, %p275
      %s278 = sadd.s32 %s277, 1
      %p281 = scmp.eq.s32.totalorder %s23, 1
      %p282 = scmp.ne.s32.totalorder %s277, %s279
      %p283 = scmp.eq.s32.totalorder %s23, 0
      %p284 = por %p282, %p283
      %p285 = scmp.ne.s32.totalorder %s277, %s279
      %p286 = scmp.eq.s32.totalorder %s28, 1
      %p287 = por %p285, %p286
      %p288 = scmp.ne.s32.totalorder %s279, %s280
      %p289 = scmp.eq.s32.totalorder %s28, 0
      %p290 = por %p288, %p289
      %p291 = scmp.ne.s32.totalorder %s279, %s280
      %p292 = scmp.eq.s32.totalorder %s29, 1
      %p293 = por %p291, %p292
      %p295 = scmp.ne.s32.totalorder %s280, %s294
      %p296 = scmp.eq.s32.totalorder %s29, 0
      %p297 = por %p295, %p296
      %s299 = sadd.s32 %s298, 1
      %p302 = scmp.eq.s32.totalorder %s23, 1
      %p303 = scmp.ne.s32.totalorder %s298, %s300
      %p304 = scmp.eq.s32.totalorder %s23, 0
      %p305 = por %p303, %p304
      %p306 = scmp.ne.s32.totalorder %s298, %s300
      %p307 = scmp.eq.s32.totalorder %s28, 1
      %p308 = por %p306, %p307
      %p309 = scmp.ne.s32.totalorder %s300, %s301
      %p310 = scmp.eq.s32.totalorder %s28, 0
      %p311 = por %p309, %p310
      %p312 = scmp.ne.s32.totalorder %s300, %s301
      %p313 = scmp.eq.s32.totalorder %s29, 1
      %p314 = por %p312, %p313
      %p316 = scmp.ne.s32.totalorder %s301, %s315
      %p317 = scmp.eq.s32.totalorder %s29, 0
      %p318 = por %p316, %p317
      %s320 = sadd.s32 %s319, 1
      %p323 = scmp.eq.s32.totalorder %s23, 1
      %p324 = scmp.ne.s32.totalorder %s319, %s321
      %p325 = scmp.eq.s32.totalorder %s23, 0
      %p326 = por %p324, %p325
      %p327 = scmp.ne.s32.totalorder %s319, %s321
      %p328 = scmp.eq.s32.totalorder %s28, 1
      %p329 = por %p327, %p328
      %p330 = scmp.ne.s32.totalorder %s321, %s322
      %p331 = scmp.eq.s32.totalorder %s28, 0
      %p332 = por %p330, %p331
      %p333 = scmp.ne.s32.totalorder %s321, %s322
      %p334 = scmp.eq.s32.totalorder %s29, 1
      %p335 = por %p333, %p334
      %p337 = scmp.ne.s32.totalorder %s322, %s336
      %p338 = scmp.eq.s32.totalorder %s29, 0
      %p339 = por %p337, %p338
      %s340 = ssub.s32 %s30, %s42
      %s341 = ssub.s32 %s31, %s38
      %s342 = sor.u32 %s340, %s341
      %p343 = scmp.eq.s32.totalorder %s342, 0
      %s345 = sadd.s32 %s344, 1
      %s346 = scalar_select %p343, %s344, %s345
      %p349 = pneg %p343
      %p350 = scmp.eq.s32.totalorder %s23, 1
      %p351 = por %p349, %p350
      %p352 = scmp.ne.s32.totalorder %s344, %s347
      %p353 = scmp.eq.s32.totalorder %s23, 0
      %p354 = por %p352, %p353
      %p355 = scmp.ne.s32.totalorder %s344, %s347
      %p356 = scmp.eq.s32.totalorder %s28, 1
      %p357 = por %p355, %p356
      %p358 = scmp.ne.s32.totalorder %s347, %s348
      %p359 = scmp.eq.s32.totalorder %s28, 0
      %p360 = por %p358, %p359
      %p361 = scmp.ne.s32.totalorder %s347, %s348
      %p362 = scmp.eq.s32.totalorder %s29, 1
      %p363 = por %p361, %p362
      %p365 = scmp.ne.s32.totalorder %s348, %s364
      %p366 = scmp.eq.s32.totalorder %s29, 0
      %p367 = por %p365, %p366
      %p368 = scmp.le.s32.totalorder 1, %s23
      %p369 = scmp.lt.s32.totalorder %s23, 3
      %p370 = pnand %p368, %p369
      %p371 = pneg %p370
      // Predicated region
      $region9: #{attention_block_pallas.1} parent=5 // pred_check
        _
      $region10: #{attention_block_pallas.1} parent=5 // pred_check_branch
        %373 = sbr.rel (%p370) target = $region12
      $region11: #{attention_block_pallas.1} parent=5 // pred_region
        %s374 = ssub.s32 %s23, 1
        // Predicated region
        $region13: #{attention_block_pallas.1} parent=11 // pred_check
          %p375 = pneg %p56
        $region14: #{attention_block_pallas.1} parent=11 // pred_check_branch
          %377 = sbr.rel (%p375) target = $region16
        $region15: #{attention_block_pallas.1} parent=11 // pred_region
          _
        $region16: #{attention_block_pallas.1} parent=11 // pred_fallthru
          _
        // Predicated region
        $region17: #{attention_block_pallas.1} parent=11 // pred_check
          %p378 = pneg %p185
        $region18: #{attention_block_pallas.1} parent=11 // pred_check_branch
          %380 = sbr.rel (%p378) target = $region20
        $region19: #{attention_block_pallas.1} parent=11 // pred_region
          _
        $region20: #{attention_block_pallas.1} parent=11 // pred_fallthru
          _
        // Predicated region
        $region21: #{attention_block_pallas.1} parent=11 // pred_check
          %p381 = pneg %p206
        $region22: #{attention_block_pallas.1} parent=11 // pred_check_branch
          %383 = sbr.rel (%p381) target = $region24
        $region23: #{attention_block_pallas.1} parent=11 // pred_region
          _
        $region24: #{attention_block_pallas.1} parent=11 // pred_fallthru
          _
        // Predicated region
        $region25: #{attention_block_pallas.1} parent=11 // pred_check
          %p384 = pneg %p227
        $region26: #{attention_block_pallas.1} parent=11 // pred_check_branch
          %386 = sbr.rel (%p384) target = $region28
        $region27: #{attention_block_pallas.1} parent=11 // pred_region
          _
        $region28: #{attention_block_pallas.1} parent=11 // pred_fallthru
          _
        // Predicated region
        $region29: #{attention_block_pallas.1} parent=11 // pred_check
          %p387 = pneg %p248
        $region30: #{attention_block_pallas.1} parent=11 // pred_check_branch
          %389 = sbr.rel (%p387) target = $region32
        $region31: #{attention_block_pallas.1} parent=11 // pred_region
          _
        $region32: #{attention_block_pallas.1} parent=11 // pred_fallthru
          _
        // Predicated region
        $region33: #{attention_block_pallas.1} parent=11 // pred_check
          %p390 = pneg %p269
        $region34: #{attention_block_pallas.1} parent=11 // pred_check_branch
          %392 = sbr.rel (%p390) target = $region36
        $region35: #{attention_block_pallas.1} parent=11 // pred_region
          _
        $region36: #{attention_block_pallas.1} parent=11 // pred_fallthru
          _
        // Predicated region
        $region37: #{attention_block_pallas.1} parent=11 // pred_check
          %p393 = pneg %p290
        $region38: #{attention_block_pallas.1} parent=11 // pred_check_branch
          %395 = sbr.rel (%p393) target = $region40
        $region39: #{attention_block_pallas.1} parent=11 // pred_region
          _
        $region40: #{attention_block_pallas.1} parent=11 // pred_fallthru
          _
        // Predicated region
        $region41: #{attention_block_pallas.1} parent=11 // pred_check
          %p396 = pneg %p311
        $region42: #{attention_block_pallas.1} parent=11 // pred_check_branch
          %398 = sbr.rel (%p396) target = $region44
        $region43: #{attention_block_pallas.1} parent=11 // pred_region
          _
        $region44: #{attention_block_pallas.1} parent=11 // pred_fallthru
          _
        // Predicated region
        $region45: #{attention_block_pallas.1} parent=11 // pred_check
          %p399 = pneg %p332
        $region46: #{attention_block_pallas.1} parent=11 // pred_check_branch
          %401 = sbr.rel (%p399) target = $region48
        $region47: #{attention_block_pallas.1} parent=11 // pred_region
          _
        $region48: #{attention_block_pallas.1} parent=11 // pred_fallthru
          _
      $region12: #{attention_block_pallas.1} parent=5 // pred_fallthru
        _
      %p402 = scmp.lt.s32.totalorder %s23, 2
      // Predicated region
      $region49: #{attention_block_pallas.1} parent=5 // pred_check
        %p403 = pneg %p402
      $region50: #{attention_block_pallas.1} parent=5 // pred_check_branch
        %405 = sbr.rel (%p403) target = $region52
      $region51: #{attention_block_pallas.1} parent=5 // pred_region
        // Predicated region
        $region53: #{attention_block_pallas.1} parent=51 // pred_check
          %p406 = pneg %p78
        $region54: #{attention_block_pallas.1} parent=51 // pred_check_branch
          %408 = sbr.rel (%p406) target = $region56
        $region55: #{attention_block_pallas.1} parent=51 // pred_region
          %p409 = scmp.lt.s32.totalorder %s30, 1
          %s410 = scalar_select %p409, %s30, 1
          %p411 = scmp.lt.s32.totalorder %s31, 0
          %s412 = scalar_select %p411, %s31, 0
          %s413 = sadd.s32 %s412, %s410
          %s414 = smul.addr %s413, 4
          %s415 = scalar_lea.vmem %s1, %s414
        $region56: #{attention_block_pallas.1} parent=51 // pred_fallthru
          _
        // Predicated region
        $region57: #{attention_block_pallas.1} parent=51 // pred_check
          %p416 = pneg %p104
        $region58: #{attention_block_pallas.1} parent=51 // pred_check_branch
          %418 = sbr.rel (%p416) target = $region60
        $region59: #{attention_block_pallas.1} parent=51 // pred_region
          %p419 = scmp.lt.s32.totalorder %s30, 1
          %s420 = scalar_select %p419, %s30, 1
          %s421 = smul.addr %s420, 4
          %s422 = scalar_lea.vmem %s2, %s421
        $region60: #{attention_block_pallas.1} parent=51 // pred_fallthru
          _
        // Predicated region
        $region61: #{attention_block_pallas.1} parent=51 // pred_check
          %p423 = pneg %p130
        $region62: #{attention_block_pallas.1} parent=51 // pred_check_branch
          %425 = sbr.rel (%p423) target = $region64
        $region63: #{attention_block_pallas.1} parent=51 // pred_region
          %p426 = scmp.lt.s32.totalorder %s30, 1
          %s427 = scalar_select %p426, %s30, 1
          %s428 = smul.addr %s427, 4
          %s429 = scalar_lea.vmem %s3, %s428
        $region64: #{attention_block_pallas.1} parent=51 // pred_fallthru
          _
        // Predicated region
        $region65: #{attention_block_pallas.1} parent=51 // pred_check
          %p430 = pneg %p158
        $region66: #{attention_block_pallas.1} parent=51 // pred_check_branch
          %432 = sbr.rel (%p430) target = $region68
        $region67: #{attention_block_pallas.1} parent=51 // pred_region
          %p433 = scmp.lt.s32.totalorder %s30, 1
          %s434 = scalar_select %p433, %s30, 1
          %p435 = scmp.lt.s32.totalorder %s31, 0
          %s436 = scalar_select %p435, %s31, 0
          %s437 = sadd.s32 %s436, %s434
          %s438 = smul.addr %s437, 4
          %s439 = scalar_lea.vmem %s4, %s438
        $region68: #{attention_block_pallas.1} parent=51 // pred_fallthru
          _
      $region52: #{attention_block_pallas.1} parent=5 // pred_fallthru
        _
      %p440 = scmp.le.s32.totalorder 1, %s23
      %p441 = scmp.lt.s32.totalorder %s23, 3
      %p442 = pnand %p440, %p441
      %p443 = pneg %p442
      // Predicated region
      $region69: #{attention_block_pallas.1} parent=5 // pred_check
        _
      $region70: #{attention_block_pallas.1} parent=5 // pred_check_branch
        %445 = sbr.rel (%p442) target = $region72
      $region71: #{attention_block_pallas.1} parent=5 // pred_region
        %s446 = ssub.s32 %s23, 1
        %p447 = pneg %p56
        %p448 = pneg %p53
        %p449 = scmp.lt.s32.totalorder %s32, 1
        %s450 = scalar_select %p449, %s32, 1
        %p451 = scmp.lt.s32.totalorder %s33, 0
        %s452 = scalar_select %p451, %s33, 0
        %s453 = sadd.s32 %s452, %s450
        %s454 = smul.addr %s453, 4
        %s455 = scalar_lea.vmem %s1, %s454
        %p456 = pneg %p84
        %p457 = pneg %p81
        %p458 = scmp.lt.s32.totalorder %s32, 1
        %s459 = scalar_select %p458, %s32, 1
        %s460 = smul.addr %s459, 4
        %s461 = scalar_lea.vmem %s2, %s460
        %p462 = pneg %p110
        %p463 = pneg %p107
        %p464 = scmp.lt.s32.totalorder %s32, 1
        %s465 = scalar_select %p464, %s32, 1
        %s466 = smul.addr %s465, 4
        %s467 = scalar_lea.vmem %s3, %s466
        %p468 = pneg %p136
        %p469 = pneg %p133
        %p470 = scmp.lt.s32.totalorder %s32, 1
        %s471 = scalar_select %p470, %s32, 1
        %p472 = scmp.lt.s32.totalorder %s33, 0
        %s473 = scalar_select %p472, %s33, 0
        %s474 = sadd.s32 %s473, %s471
        %s475 = smul.addr %s474, 4
        %s476 = scalar_lea.vmem %s4, %s475
        %p477 = pneg %p164
        %p478 = pneg %p161
        %p479 = pneg %p185
        %p480 = pneg %p182
        %p481 = pneg %p206
        %p482 = pneg %p203
        %p483 = pneg %p227
        %p484 = pneg %p224
        %p485 = pneg %p248
        %p486 = pneg %p245
        %p487 = pneg %p269
        %p488 = pneg %p266
        %p489 = pneg %p290
        %p490 = pneg %p287
        %p491 = pneg %p311
        %p492 = pneg %p308
        %p493 = pneg %p332
        %p494 = pneg %p329
        %p495 = pneg %p360
        %p496 = pneg %p357
        %s497 = sand.u32 %s347, 1
        %s498 = scalar_lea.sflag [#allocation6], %s497
        %s499 = sand.u32 %s347, 1
        %s500 = smul.addr %s499, 8
        %s501 = scalar_lea.vmem [#allocation5], %s500
        %p502 = scmp.lt.s32.totalorder %s32, 1
        %s503 = scalar_select %p502, %s32, 1
        %p504 = scmp.lt.s32.totalorder %s33, 0
        %s505 = scalar_select %p504, %s33, 0
        %s506 = sadd.s32 %s505, %s503
        %s507 = smul.addr %s506, 4
        %s508 = scalar_lea.vmem %s1, %s507
        %p509 = scmp.lt.s32.totalorder %s32, 1
        %s510 = scalar_select %p509, %s32, 1
        %s511 = smul.addr %s510, 4
        %s512 = scalar_lea.vmem %s2, %s511
        %p513 = scmp.lt.s32.totalorder %s32, 1
        %s514 = scalar_select %p513, %s32, 1
        %s515 = smul.addr %s514, 4
        %s516 = scalar_lea.vmem %s3, %s515
        %p517 = scmp.lt.s32.totalorder %s32, 1
        %s518 = scalar_select %p517, %s32, 1
        %p519 = scmp.lt.s32.totalorder %s33, 0
        %s520 = scalar_select %p519, %s33, 0
        %s521 = sadd.s32 %s520, %s518
        %s522 = smul.addr %s521, 4
        %s523 = scalar_lea.vmem %s4, %s522
        %s525 = sld [smem:[#allocation4]]
        %p526 = scmp.eq.s32.totalorder %s33, 0
        // Predicated region
        $region73: #{attention_block_pallas.1} parent=71 // pred_check
          %p527 = pneg %p526
        $region74: #{attention_block_pallas.1} parent=71 // pred_check_branch
          %529 = sbr.rel (%p527) target = $region76
        $region75: #{attention_block_pallas.1} parent=71 // pred_region
          %v530 = vld [vmem:[%s512] sm:$0xf]
          %v531 = vld [vmem:[%s516] sm:$0xf]
          %v532 = vld [vmem:[%s7] sm:$0xf]
          %v533 = vld [vmem:[%s7 + $0x4] sm:$0xf]
          %v534 = vld [vmem:[%s7 + $0x8] sm:$0xf]
          %v535 = vld [vmem:[%s7 + $0xc] sm:$0xf]
          %v536 = vld [vmem:[%s8] sm:$0x1]
          %v538 = vlaneseq
          %v539 = vshrl.u32 %v538, 7
          %v540 = vsub.s32 0, %v539
          %v541 = vrot.slane %v536, %v540
          %v547 = vunpack.c.l.b16 %v532
          %v548 = vunpack.c.l.b16 %v533
          %v549 = vunpack.c.l.b16 %v534
          %v550 = vunpack.c.l.b16 %v535
          %v551 = vpack.c.b16 %v548, %v547
          %v552 = vpack.c.b16 %v550, %v549
          %vm555 = vcmask 261120
          %v557 = vsel %vm555, %v530, 0
          %559 = vmatprep.subr.bf16.mxu0 0
          %560 = vmatpush1.bf16.msra.mxu0 %v551
          %561 = vmatprep.subr.bf16.mxu0 0
          %562 = vmatpush1.bf16.msra.mxu0 %v552
          %563 = vmatprep.subr.bf16.mxu0 0
          %564 = vmatpush1.bf16.msra.mxu0 0
          %565 = vmatprep.subr.bf16.mxu0 0
          %566 = vmatpush1.bf16.msra.mxu0 0
          %567 = vmatprep.subr.bf16.mxu0 0
          %568 = vmatpush1.bf16.msra.mxu0 0
          %569 = vmatprep.subr.bf16.mxu0 0
          %570 = vmatpush1.bf16.msra.mxu0 0
          %571 = vmatprep.subr.bf16.mxu0 0
          %572 = vmatpush1.bf16.msra.mxu0 0
          %573 = vmatprep.subr.bf16.mxu0 0
          %574 = vmatpush1.bf16.msra.mxu0 0
          %575 = vmatprep.subr.bf16.mxu0 0
          %576 = vmatpush1.bf16.msra.mxu0 0
          %577 = vmatprep.subr.bf16.mxu0 0
          %578 = vmatpush1.bf16.msra.mxu0 0
          %579 = vmatprep.subr.bf16.mxu0 0
          %580 = vmatpush1.bf16.msra.mxu0 0
          %581 = vmatprep.subr.bf16.mxu0 0
          %582 = vmatpush1.bf16.msra.mxu0 0
          %583 = vmatprep.subr.bf16.mxu0 0
          %584 = vmatpush1.bf16.msra.mxu0 0
          %585 = vmatprep.subr.bf16.mxu0 0
          %586 = vmatpush1.bf16.msra.mxu0 0
          %587 = vmatprep.subr.bf16.mxu0 0
          %588 = vmatpush1.bf16.msra.mxu0 0
          %589 = vmatprep.subr.bf16.mxu0 0
          %590 = vmatpush1.bf16.msra.mxu0 0
          %591 = vmatprep.mubr.bf16.mxu0 0
          %592 = vmatmul.mubr.bf16.gmra.mrb[0].mxu0 %v557
          %v593 = vpop.f32.mrb[0].mxu0
          %v594 = vadd.f32 %v541, %v593
          %v595 = vpop.f32.mrb[0].mxu0
          %v596 = vpop.f32.mrb[0].mxu0
          %v597 = vpop.f32.mrb[0].mxu0
          %598 = vdwg.mxu0
          %v599 = vld [vmem:[%s9] sm:$0xf]
          %v600 = vld [vmem:[%s9 + $0x4] sm:$0xf]
          %v601 = vld [vmem:[%s9 + $0x8] sm:$0xf]
          %v602 = vld [vmem:[%s9 + $0xc] sm:$0xf]
          %v603 = vld [vmem:[%s10] sm:$0x1]
          %v605 = vlaneseq
          %v606 = vshrl.u32 %v605, 7
          %v607 = vsub.s32 0, %v606
          %v608 = vrot.slane %v603, %v607
          %v614 = vunpack.c.l.b16 %v599
          %v615 = vunpack.c.l.b16 %v600
          %v616 = vunpack.c.l.b16 %v601
          %v617 = vunpack.c.l.b16 %v602
          %v618 = vpack.c.b16 %v615, %v614
          %v619 = vpack.c.b16 %v617, %v616
          %v623 = vsel %vm555, %v531, 0
          %625 = vmatprep.subr.bf16.mxu0 0
          %626 = vmatpush1.bf16.msra.mxu0 %v618
          %627 = vmatprep.subr.bf16.mxu0 0
          %628 = vmatpush1.bf16.msra.mxu0 %v619
          %629 = vmatprep.subr.bf16.mxu0 0
          %630 = vmatpush1.bf16.msra.mxu0 0
          %631 = vmatprep.subr.bf16.mxu0 0
          %632 = vmatpush1.bf16.msra.mxu0 0
          %633 = vmatprep.subr.bf16.mxu0 0
          %634 = vmatpush1.bf16.msra.mxu0 0
          %635 = vmatprep.subr.bf16.mxu0 0
          %636 = vmatpush1.bf16.msra.mxu0 0
          %637 = vmatprep.subr.bf16.mxu0 0
          %638 = vmatpush1.bf16.msra.mxu0 0
          %639 = vmatprep.subr.bf16.mxu0 0
          %640 = vmatpush1.bf16.msra.mxu0 0
          %641 = vmatprep.subr.bf16.mxu0 0
          %642 = vmatpush1.bf16.msra.mxu0 0
          %643 = vmatprep.subr.bf16.mxu0 0
          %644 = vmatpush1.bf16.msra.mxu0 0
          %645 = vmatprep.subr.bf16.mxu0 0
          %646 = vmatpush1.bf16.msra.mxu0 0
          %647 = vmatprep.subr.bf16.mxu0 0
          %648 = vmatpush1.bf16.msra.mxu0 0
          %649 = vmatprep.subr.bf16.mxu0 0
          %650 = vmatpush1.bf16.msra.mxu0 0
          %651 = vmatprep.subr.bf16.mxu0 0
          %652 = vmatpush1.bf16.msra.mxu0 0
          %653 = vmatprep.subr.bf16.mxu0 0
          %654 = vmatpush1.bf16.msra.mxu0 0
          %655 = vmatprep.subr.bf16.mxu0 0
          %656 = vmatpush1.bf16.msra.mxu0 0
          %657 = vmatprep.mubr.bf16.mxu0 0
          %658 = vmatmul.mubr.bf16.gmra.mrb[0].mxu0 %v623
          %v659 = vpop.f32.mrb[0].mxu0
          %v660 = vadd.f32 %v608, %v659
          %v661 = vpop.f32.mrb[0].mxu0
          %v662 = vpop.f32.mrb[0].mxu0
          %v663 = vpop.f32.mrb[0].mxu0
          %664 = vdwg.mxu0
          %665 = vxpose.xlu0.b32.start [1/16] %v594, 128
          %666 = vxpose.xlu0.b32.cont [2/16] 0.0, 128
          %667 = vxpose.xlu0.b32.cont [3/16] 0.0, 128
          %668 = vxpose.xlu0.b32.cont [4/16] 0.0, 128
          %669 = vxpose.xlu0.b32.cont [5/16] 0.0, 128
          %670 = vxpose.xlu0.b32.cont [6/16] 0.0, 128
          %671 = vxpose.xlu0.b32.cont [7/16] 0.0, 128
          %672 = vxpose.xlu0.b32.cont [8/16] 0.0, 128
          %673 = vxpose.xlu0.b32.cont [9/16] 0.0, 128
          %674 = vxpose.xlu0.b32.cont [10/16] 0.0, 128
          %675 = vxpose.xlu0.b32.cont [11/16] 0.0, 128
          %676 = vxpose.xlu0.b32.cont [12/16] 0.0, 128
          %677 = vxpose.xlu0.b32.cont [13/16] 0.0, 128
          %678 = vxpose.xlu0.b32.cont [14/16] 0.0, 128
          %679 = vxpose.xlu0.b32.cont [15/16] 0.0, 128
          %680 = vxpose.xlu0.b32.end [16/16] 0.0, 128
          %v681 = vpop.trf.xlu0
          %v682 = vpop.trf.xlu0
          %v683 = vpop.trf.xlu0
          %v684 = vpop.trf.xlu0
          %v685 = vpop.trf.xlu0
          %v686 = vpop.trf.xlu0
          %v687 = vpop.trf.xlu0
          %v688 = vpop.trf.xlu0
          %v689 = vpop.trf.xlu0
          %v690 = vpop.trf.xlu0
          %v691 = vpop.trf.xlu0
          %v692 = vpop.trf.xlu0
          %v693 = vpop.trf.xlu0
          %v694 = vpop.trf.xlu0
          %v695 = vpop.trf.xlu0
          %v696 = vpop.trf.xlu0
          %v697 = vpack.c.bf16 %v682, %v681
          %v698 = vpack.c.bf16 %v684, %v683
          %v699 = vpack.c.bf16 %v686, %v685
          %v700 = vpack.c.bf16 %v688, %v687
          %v701 = vpack.c.bf16 %v690, %v689
          %v702 = vpack.c.bf16 %v692, %v691
          %v703 = vpack.c.bf16 %v694, %v693
          %v704 = vpack.c.bf16 %v696, %v695
          %vm705 = vcmask 64512
          %706 = vst.msk [vmem:[#allocation2] sm:$0xff] %vm705, %v697
          %707 = vst.msk [vmem:[#allocation2 + $0x8] sm:$0xff] %vm705, %v698
          %708 = vst.msk [vmem:[#allocation2 + $0x10] sm:$0xff] %vm705, %v699
          %709 = vst.msk [vmem:[#allocation2 + $0x18] sm:$0xff] %vm705, %v700
          %710 = vst.msk [vmem:[#allocation2 + $0x20] sm:$0xff] %vm705, %v701
          %711 = vst.msk [vmem:[#allocation2 + $0x28] sm:$0xff] %vm705, %v702
          %712 = vst.msk [vmem:[#allocation2 + $0x30] sm:$0xff] %vm705, %v703
          %713 = vst.msk [vmem:[#allocation2 + $0x38] sm:$0xff] %vm705, %v704
          %v714 = vpack.c.bf16 %v660, %v660
          %715 = vst [vmem:[#allocation3] sm:$0xf] %v714
        $region76: #{attention_block_pallas.1} parent=71 // pred_fallthru
          _
        %v716 = vld [vmem:[%s508] sm:$0xf]
        %v717 = vld [vmem:[%s5] sm:$0xf]
        %v718 = vld [vmem:[%s5 + $0x4] sm:$0xf]
        %v719 = vld [vmem:[%s5 + $0x8] sm:$0xf]
        %v720 = vld [vmem:[%s5 + $0xc] sm:$0xf]
        %v721 = vld [vmem:[%s6] sm:$0x1]
        %v723 = vlaneseq
        %v724 = vshrl.u32 %v723, 7
        %v725 = vsub.s32 0, %v724
        %v726 = vrot.slane %v721, %v725
        %v732 = vunpack.c.l.b16 %v717
        %v733 = vunpack.c.l.b16 %v718
        %v734 = vunpack.c.l.b16 %v719
        %v735 = vunpack.c.l.b16 %v720
        %v736 = vpack.c.b16 %v733, %v732
        %v737 = vpack.c.b16 %v735, %v734
        %vm740 = vcmask 261120
        %v742 = vsel %vm740, %v716, 0
        %744 = vmatprep.subr.bf16.mxu0 0
        %745 = vmatpush1.bf16.msra.mxu0 %v736
        %746 = vmatprep.subr.bf16.mxu0 0
        %747 = vmatpush1.bf16.msra.mxu0 %v737
        %748 = vmatprep.subr.bf16.mxu0 0
        %749 = vmatpush1.bf16.msra.mxu0 0
        %750 = vmatprep.subr.bf16.mxu0 0
        %751 = vmatpush1.bf16.msra.mxu0 0
        %752 = vmatprep.subr.bf16.mxu0 0
        %753 = vmatpush1.bf16.msra.mxu0 0
        %754 = vmatprep.subr.bf16.mxu0 0
        %755 = vmatpush1.bf16.msra.mxu0 0
        %756 = vmatprep.subr.bf16.mxu0 0
        %757 = vmatpush1.bf16.msra.mxu0 0
        %758 = vmatprep.subr.bf16.mxu0 0
        %759 = vmatpush1.bf16.msra.mxu0 0
        %760 = vmatprep.subr.bf16.mxu0 0
        %761 = vmatpush1.bf16.msra.mxu0 0
        %762 = vmatprep.subr.bf16.mxu0 0
        %763 = vmatpush1.bf16.msra.mxu0 0
        %764 = vmatprep.subr.bf16.mxu0 0
        %765 = vmatpush1.bf16.msra.mxu0 0
        %766 = vmatprep.subr.bf16.mxu0 0
        %767 = vmatpush1.bf16.msra.mxu0 0
        %768 = vmatprep.subr.bf16.mxu0 0
        %769 = vmatpush1.bf16.msra.mxu0 0
        %770 = vmatprep.subr.bf16.mxu0 0
        %771 = vmatpush1.bf16.msra.mxu0 0
        %772 = vmatprep.subr.bf16.mxu0 0
        %773 = vmatpush1.bf16.msra.mxu0 0
        %774 = vmatprep.subr.bf16.mxu0 0
        %775 = vmatpush1.bf16.msra.mxu0 0
        %776 = vmatprep.mubr.bf16.mxu0 0
        %777 = vmatmul.mubr.bf16.gmra.mrb[0].mxu0 %v742
        %v778 = vpop.f32.mrb[0].mxu0
        %v779 = vadd.f32 %v726, %v778
        %v780 = vpop.f32.mrb[0].mxu0
        %v781 = vpop.f32.mrb[0].mxu0
        %v782 = vpop.f32.mrb[0].mxu0
        %783 = vdwg.mxu0
        %v784 = vpack.c.bf16 %v779, %v779
        %v785 = vld [vmem:[#allocation2] sm:$0xff]
        %v786 = vld [vmem:[#allocation2 + $0x8] sm:$0xff]
        %v787 = vld [vmem:[#allocation2 + $0x10] sm:$0xff]
        %v788 = vld [vmem:[#allocation2 + $0x18] sm:$0xff]
        %v789 = vld [vmem:[#allocation2 + $0x20] sm:$0xff]
        %v790 = vld [vmem:[#allocation2 + $0x28] sm:$0xff]
        %v791 = vld [vmem:[#allocation2 + $0x30] sm:$0xff]
        %v792 = vld [vmem:[#allocation2 + $0x38] sm:$0xff]
        %v793 = vld [vmem:[%s523] sm:$0xf]
        %v794 = vunpack.c.l.bf16 %v793
        %v795 = vstv %s525
        %v796 = vmul.f32 %v794, %v795
        %797 = vmatprep.subr.bf16.mxu0 0
        %798 = vmatpush1.bf16.msra.mxu0 %v785
        %799 = vmatprep.subr.bf16.mxu0 0
        %800 = vmatpush1.bf16.msra.mxu0 %v786
        %801 = vmatprep.subr.bf16.mxu0 0
        %802 = vmatpush1.bf16.msra.mxu0 %v787
        %803 = vmatprep.subr.bf16.mxu0 0
        %804 = vmatpush1.bf16.msra.mxu0 %v788
        %805 = vmatprep.subr.bf16.mxu0 0
        %806 = vmatpush1.bf16.msra.mxu0 %v789
        %807 = vmatprep.subr.bf16.mxu0 0
        %808 = vmatpush1.bf16.msra.mxu0 %v790
        %809 = vmatprep.subr.bf16.mxu0 0
        %810 = vmatpush1.bf16.msra.mxu0 %v791
        %811 = vmatprep.subr.bf16.mxu0 0
        %812 = vmatpush1.bf16.msra.mxu0 %v792
        %813 = vmatprep.subr.bf16.mxu0 0
        %814 = vmatpush1.bf16.msra.mxu0 0
        %815 = vmatprep.subr.bf16.mxu0 0
        %816 = vmatpush1.bf16.msra.mxu0 0
        %817 = vmatprep.subr.bf16.mxu0 0
        %818 = vmatpush1.bf16.msra.mxu0 0
        %819 = vmatprep.subr.bf16.mxu0 0
        %820 = vmatpush1.bf16.msra.mxu0 0
        %821 = vmatprep.subr.bf16.mxu0 0
        %822 = vmatpush1.bf16.msra.mxu0 0
        %823 = vmatprep.subr.bf16.mxu0 0
        %824 = vmatpush1.bf16.msra.mxu0 0
        %825 = vmatprep.subr.bf16.mxu0 0
        %826 = vmatpush1.bf16.msra.mxu0 0
        %827 = vmatprep.subr.bf16.mxu0 0
        %828 = vmatpush1.bf16.msra.mxu0 0
        %829 = vmatprep.mubr.bf16.mxu0 0
        %830 = vmatmul.mubr.bf16.gmra.mrb[0].mxu0 %v784
        %v831 = vpop.f32.mrb[0].mxu0
        %v832 = vadd.f32 %v796, %v831
        %v833 = vpop.f32.mrb[0].mxu0
        %v834 = vpop.f32.mrb[0].mxu0
        %v835 = vpop.f32.mrb[0].mxu0
        %836 = vdwg.mxu0
        %vm837 = vcmask 64512
        %v838 = vsel %vm837, %v832, -inf
        %839 = vmax.xlane.f32.xlu0 %v838
        %v840 = vpop.xlane.xlu0 %839
        %v841 = vsub.f32 %v832, %v840
        %v842 = vmul.f32 %v841, 1.442695
        %v843 = vpow.pop %v842
        %v844 = vsel %vm837, %v843, 0.0
        %845 = vadd.xlane.f32.xlu0 %v844
        %v846 = vpop.xlane.xlu0 %845
        %v847 = vrcp.pop %v846
        %v848 = vmul.f32 %v843, %v847
        %v849 = vpack.c.bf16 %v848, %v848
        %v850 = vld [vmem:[#allocation3] sm:$0xf]
        %v852 = vsel %vm837, %v849, 0
        %vm854 = vcmask 1043456
        %v856 = vsel %vm854, %v850, 0
        %858 = vmatprep.subr.bf16.mxu0 0
        %859 = vmatpush1.bf16.msra.mxu0 %v856
        %860 = vmatprep.subr.bf16.mxu0 0
        %861 = vmatpush1.bf16.msra.mxu0 0
        %862 = vmatprep.subr.bf16.mxu0 0
        %863 = vmatpush1.bf16.msra.mxu0 0
        %864 = vmatprep.subr.bf16.mxu0 0
        %865 = vmatpush1.bf16.msra.mxu0 0
        %866 = vmatprep.subr.bf16.mxu0 0
        %867 = vmatpush1.bf16.msra.mxu0 0
        %868 = vmatprep.subr.bf16.mxu0 0
        %869 = vmatpush1.bf16.msra.mxu0 0
        %870 = vmatprep.subr.bf16.mxu0 0
        %871 = vmatpush1.bf16.msra.mxu0 0
        %872 = vmatprep.subr.bf16.mxu0 0
        %873 = vmatpush1.bf16.msra.mxu0 0
        %874 = vmatprep.subr.bf16.mxu0 0
        %875 = vmatpush1.bf16.msra.mxu0 0
        %876 = vmatprep.subr.bf16.mxu0 0
        %877 = vmatpush1.bf16.msra.mxu0 0
        %878 = vmatprep.subr.bf16.mxu0 0
        %879 = vmatpush1.bf16.msra.mxu0 0
        %880 = vmatprep.subr.bf16.mxu0 0
        %881 = vmatpush1.bf16.msra.mxu0 0
        %882 = vmatprep.subr.bf16.mxu0 0
        %883 = vmatpush1.bf16.msra.mxu0 0
        %884 = vmatprep.subr.bf16.mxu0 0
        %885 = vmatpush1.bf16.msra.mxu0 0
        %886 = vmatprep.subr.bf16.mxu0 0
        %887 = vmatpush1.bf16.msra.mxu0 0
        %888 = vmatprep.subr.bf16.mxu0 0
        %889 = vmatpush1.bf16.msra.mxu0 0
        %890 = vmatprep.mubr.bf16.mxu0 0
        %891 = vmatmul.mubr.bf16.gmra.mrb[0].mxu0 %v852
        %v892 = vpop.f32.mrb[0].mxu0
        %v893 = vadd.f32 0.0, %v892
        %v894 = vpop.f32.mrb[0].mxu0
        %v895 = vpop.f32.mrb[0].mxu0
        %v896 = vpop.f32.mrb[0].mxu0
        %897 = vdwg.mxu0
        %v898 = vpack.c.bf16 %v893, %v893
        %v899 = vld [vmem:[%s11] sm:$0xf]
        %v900 = vld [vmem:[%s11 + $0x4] sm:$0xf]
        %v901 = vld [vmem:[%s11 + $0x8] sm:$0xf]
        %v902 = vld [vmem:[%s11 + $0xc] sm:$0xf]
        %v903 = vld [vmem:[%s11 + $0x10] sm:$0xf]
        %v904 = vld [vmem:[%s11 + $0x14] sm:$0xf]
        %v905 = vld [vmem:[%s11 + $0x18] sm:$0xf]
        %v906 = vld [vmem:[%s11 + $0x1c] sm:$0xf]
        %v907 = vld [vmem:[%s11 + $0x20] sm:$0xf]
        %v908 = vld [vmem:[%s11 + $0x24] sm:$0xf]
        %v909 = vld [vmem:[%s11 + $0x28] sm:$0xf]
        %v910 = vld [vmem:[%s11 + $0x2c] sm:$0xf]
        %v911 = vld [vmem:[%s11 + $0x30] sm:$0xf]
        %v912 = vld [vmem:[%s11 + $0x34] sm:$0xf]
        %v913 = vld [vmem:[%s11 + $0x38] sm:$0xf]
        %v914 = vld [vmem:[%s11 + $0x3c] sm:$0xf]
        %v915 = vld [vmem:[%s12] sm:$0x1]
        %v917 = vlaneseq
        %v918 = vshrl.u32 %v917, 7
        %v919 = vsub.s32 0, %v918
        %v920 = vrot.slane %v915, %v919
        %v938 = vunpack.c.l.b16 %v899
        %v939 = vunpack.c.l.b16 %v900
        %v940 = vunpack.c.l.b16 %v901
        %v941 = vunpack.c.l.b16 %v902
        %v942 = vunpack.c.l.b16 %v903
        %v943 = vunpack.c.l.b16 %v904
        %v944 = vunpack.c.l.b16 %v905
        %v945 = vunpack.c.l.b16 %v906
        %v946 = vunpack.c.l.b16 %v907
        %v947 = vunpack.c.l.b16 %v908
        %v948 = vunpack.c.l.b16 %v909
        %v949 = vunpack.c.l.b16 %v910
        %v950 = vunpack.c.l.b16 %v911
        %v951 = vunpack.c.l.b16 %v912
        %v952 = vunpack.c.l.b16 %v913
        %v953 = vunpack.c.l.b16 %v914
        %v954 = vpack.c.b16 %v939, %v938
        %v955 = vpack.c.b16 %v941, %v940
        %v956 = vpack.c.b16 %v943, %v942
        %v957 = vpack.c.b16 %v945, %v944
        %v958 = vpack.c.b16 %v947, %v946
        %v959 = vpack.c.b16 %v949, %v948
        %v960 = vpack.c.b16 %v951, %v950
        %v961 = vpack.c.b16 %v953, %v952
        %970 = vmatprep.subr.bf16.mxu0 0
        %971 = vmatpush1.bf16.msra.mxu0 %v954
        %972 = vmatprep.subr.bf16.mxu0 0
        %973 = vmatpush1.bf16.msra.mxu0 %v955
        %974 = vmatprep.subr.bf16.mxu0 0
        %975 = vmatpush1.bf16.msra.mxu0 %v956
        %976 = vmatprep.subr.bf16.mxu0 0
        %977 = vmatpush1.bf16.msra.mxu0 %v957
        %978 = vmatprep.subr.bf16.mxu0 0
        %979 = vmatpush1.bf16.msra.mxu0 %v958
        %980 = vmatprep.subr.bf16.mxu0 0
        %981 = vmatpush1.bf16.msra.mxu0 %v959
        %982 = vmatprep.subr.bf16.mxu0 0
        %983 = vmatpush1.bf16.msra.mxu0 %v960
        %984 = vmatprep.subr.bf16.mxu0 0
        %985 = vmatpush1.bf16.msra.mxu0 %v961
        %986 = vmatprep.subr.bf16.mxu0 0
        %987 = vmatpush1.bf16.msra.mxu0 0
        %988 = vmatprep.subr.bf16.mxu0 0
        %989 = vmatpush1.bf16.msra.mxu0 0
        %990 = vmatprep.subr.bf16.mxu0 0
        %991 = vmatpush1.bf16.msra.mxu0 0
        %992 = vmatprep.subr.bf16.mxu0 0
        %993 = vmatpush1.bf16.msra.mxu0 0
        %994 = vmatprep.subr.bf16.mxu0 0
        %995 = vmatpush1.bf16.msra.mxu0 0
        %996 = vmatprep.subr.bf16.mxu0 0
        %997 = vmatpush1.bf16.msra.mxu0 0
        %998 = vmatprep.subr.bf16.mxu0 0
        %999 = vmatpush1.bf16.msra.mxu0 0
        %1000 = vmatprep.subr.bf16.mxu0 0
        %1001 = vmatpush1.bf16.msra.mxu0 0
        %1002 = vmatprep.mubr.bf16.mxu0 0
        %1003 = vmatmul.mubr.bf16.gmra.mrb[0].mxu0 %v898
        %v1004 = vpop.f32.mrb[0].mxu0
        %v1005 = vadd.f32 %v920, %v1004
        %v1006 = vpop.f32.mrb[0].mxu0
        %v1007 = vpop.f32.mrb[0].mxu0
        %v1008 = vpop.f32.mrb[0].mxu0
        %1009 = vdwg.mxu0
        %1010 = vst [vmem:[%s501] sm:$0xff] %v1005
        %s1011 = sand.u32 %s347, 1
        %s1012 = scalar_lea.sflag [#allocation6], %s1011
        %s1013 = sand.u32 %s347, 1
        %s1014 = smul.addr %s1013, 8
        %s1015 = scalar_lea.vmem [#allocation5], %s1014
        // Predicated region
        $region77: #{attention_block_pallas.1} parent=71 // pred_check
          %p1016 = pneg %p357
        $region78: #{attention_block_pallas.1} parent=71 // pred_check_branch
          %1018 = sbr.rel (%p1016) target = $region80
        $region79: #{attention_block_pallas.1} parent=71 // pred_region
          %s1020 = ssub.s32 128, 128
          %1021 = vsyncadd %s1012, %s1020
          %s1022 = sadd.s32 %s33, %s32
          %s1023 = smul.addr %s1022, 128
          %s1024 = scalar_lea.hbm %s13, %s1023
          %s1026 = sshll.u32 %s1015, 4
          %s1027 = int_to_ptr.vmem [resolvable:$true] %s1026
          %1029 = dma.vmem_to_hbm [thread:$0]  %s1027, 128, %s1024, %s1012
        $region80: #{attention_block_pallas.1} parent=71 // pred_fallthru
          _
      $region72: #{attention_block_pallas.1} parent=5 // pred_fallthru
        _
      %p1030 = scmp.le.s32.totalorder 2, %s23
      // Predicated region
      $region81: #{attention_block_pallas.1} parent=5 // pred_check
        %p1031 = pneg %p1030
      $region82: #{attention_block_pallas.1} parent=5 // pred_check_branch
        %1033 = sbr.rel (%p1031) target = $region84
      $region83: #{attention_block_pallas.1} parent=5 // pred_region
        %s1034 = ssub.s32 %s23, 2
        // Predicated region
        $region85: #{attention_block_pallas.1} parent=83 // pred_check
          %p1035 = pneg %p363
        $region86: #{attention_block_pallas.1} parent=83 // pred_check_branch
          %1037 = sbr.rel (%p1035) target = $region88
        $region87: #{attention_block_pallas.1} parent=83 // pred_region
          %s1038 = sand.u32 %s348, 1
          %s1039 = scalar_lea.sflag [#allocation6], %s1038
          %s1040 = sand.u32 %s348, 1
          %s1041 = smul.addr %s1040, 8
          %s1042 = scalar_lea.vmem [#allocation5], %s1041
          %1043 = dma.done %s1039, 128
        $region88: #{attention_block_pallas.1} parent=83 // pred_fallthru
          _
      $region84: #{attention_block_pallas.1} parent=5 // pred_fallthru
        _
    $region6: #{attention_block_pallas.1} parent=1 // loop_footer
      %s27 = sadd.s32 1, %s23
    $region7: #{attention_block_pallas.1} parent=1 // loop_footer_branch
      %22 = sbr.rel target = $region3
    $region8: #{attention_block_pallas.1} parent=1 // loop_exit
      _
    %1044 = vsyncpa [#allocation6], 1
    %s1045 = scalar_lea.sflag [#allocation6], 1
    %1046 = vsyncpa %s1045, 1

</llo_original>
